<compile_context>
chip_gen: v5e
topology: v5e:2x2
jax: 0.10.0
libtpu: 0.0.40
codegen_flags: <defaults>
</compile_context>

<pallas_src>
import functools

import jax
import jax.numpy as jnp
from jax.experimental import pallas as pl
from jax.experimental.pallas import tpu as pltpu

_N_H = 6          # horizons
_N_W = 3          # weights per horizon (1+p, 1, 1-p)
_FOLD = 7         # original rows folded per lane-row: 7 * 18 = 126 lanes
_P = 2            # leading "parallel" grid axis (2 TensorCores on v7x)
_MAX_BM = 2048    # folded rows per tile (~1 MiB f32 pres block, double-buffered)


def _comple_kernel(pres_ref, tars_ref, e_ref, out_ref, *, inv_denom):
    """One (BM, 126)/(BM, 42) tile: expand targets on the MXU, accumulate the
    scaled sum of squared errors into the resident output block."""
    i = pl.program_id(1)

    @pl.when(i == 0)
    def _init():
        out_ref[...] = jnp.zeros_like(out_ref)

    p = pres_ref[...].astype(jnp.float32)
    t = tars_ref[...].astype(jnp.float32)
    exp_t = jnp.dot(t, e_ref[...], preferred_element_type=jnp.float32)
    diff = p - exp_t
    psum = jnp.sum(diff * diff) * inv_denom
    out_ref[...] += psum


def make_weights(percs):
    """weights buffer from CompleLoss.__init__: shape (6, 3), f32."""
    p = jnp.asarray(percs, dtype=jnp.float32)
    ones = jnp.ones_like(p)
    return jnp.stack([ones + p, ones, ones - p], axis=-1)


def comple_loss(pres, tars, percs=(0.3, 0.25, 0.2, 0.15, 0.1, 0.05), iscap=None):
    b = tars.shape[0]
    n_flat = _N_H * _N_W                       # 18

    # Weight-expansion matrices (tiny; constant-folds under jit).
    weights = make_weights(percs)                                            # (6, 3)
    eye_h = jnp.eye(_N_H, dtype=jnp.float32)
    e_small = (weights[:, None, :] * eye_h[:, :, None]).reshape(_N_H, n_flat)  # (6, 18)
    e_big = jnp.kron(jnp.eye(_FOLD, dtype=jnp.float32), e_small)             # (42, 126)

    wide_p = _FOLD * n_flat   # 126
    wide_t = _FOLD * _N_H     # 42

    # Fold + pad the batch: Bf folded rows, padded to P * T * BM so every grid
    # block is full (zero padding is exact thanks to block-diagonal e_big).
    bf = pl.cdiv(b, _FOLD)
    bm = min(_MAX_BM, max(8, 8 * pl.cdiv(pl.cdiv(bf, _P), 8)))
    t_steps = pl.cdiv(bf, _P * bm)
    bp = _P * t_steps * bm

    pres_flat = pres.reshape(-1)     # native dtype: no wrapper-side astype copies
    tars_flat = tars.reshape(-1)
    pad_p = bp * wide_p - pres_flat.shape[0]
    pad_t = bp * wide_t - tars_flat.shape[0]
    if pad_p:
        pres_flat = jnp.pad(pres_flat, (0, pad_p))
    if pad_t:
        tars_flat = jnp.pad(tars_flat, (0, pad_t))
    presf = pres_flat.reshape(bp, wide_p)
    tarsf = tars_flat.reshape(bp, wide_t)

    if iscap:
        denom = float(b * _N_H)            # _cap_forward: mean over (b, 6) row-sums
    else:
        denom = float(b * _N_H * _N_W)     # _fc_forward: plain MSE over b*18 elems

    kernel = functools.partial(_comple_kernel, inv_denom=1.0 / denom)

    cost = pl.CostEstimate(
        flops=2 * bp * wide_t * wide_p + 3 * bp * wide_p,
        transcendentals=0,
        bytes_accessed=(presf.size * presf.dtype.itemsize
                        + tarsf.size * tarsf.dtype.itemsize
                        + e_big.size * 4 + _P * 8 * 128 * 4),
    )

    out = pl.pallas_call(
        kernel,
        out_shape=jax.ShapeDtypeStruct((_P * 8, 128), jnp.float32),
        grid_spec=pltpu.PrefetchScalarGridSpec(
            num_scalar_prefetch=0,
            grid=(_P, t_steps),
            in_specs=[
                pl.BlockSpec((bm, wide_p), lambda c, i, T=t_steps: (c * T + i, 0)),
                pl.BlockSpec((bm, wide_t), lambda c, i, T=t_steps: (c * T + i, 0)),
                pl.BlockSpec((wide_t, wide_p), lambda c, i: (0, 0)),
            ],
            out_specs=pl.BlockSpec((8, 128), lambda c, i: (c, 0)),
        ),
        compiler_params=pltpu.CompilerParams(
            dimension_semantics=("parallel", "arbitrary")),
        cost_estimate=cost,
    )(presf, tarsf, e_big)

    # Each part's (8,128) block holds its partial (broadcast); add the P partials.
    return jnp.sum(out[0:_P * 8:8, 0])


if __name__ == "__main__":
    key = jax.random.PRNGKey(0)
    k1, k2, k3, k4, k5 = jax.random.split(key, 5)

    loss_fn = jax.jit(comple_loss, static_argnames=("percs", "iscap"))

    # Small shapes implied by the module: batch=2, 6 horizons x 3 weights.
    B = 2
    tars = jax.random.normal(k1, (B, _N_H), dtype=jnp.float32)
    pres_fc = jax.random.normal(k2, (B, _N_H * _N_W), dtype=jnp.float32)    # fc head
    pres_cap = jax.random.normal(k3, (B, _N_H, _N_W), dtype=jnp.float32)    # cap head

    loss_fc = loss_fn(pres_fc, tars)                  # _fc_forward path
    loss_cap = loss_fn(pres_cap, tars, iscap=True)    # _cap_forward path

    # A batch that is not a multiple of 7 (exercises the fold/pad path).
    B2 = 37
    tars2 = jax.random.normal(k4, (B2, _N_H), dtype=jnp.float32)
    pres2 = jax.random.normal(k5, (B2, _N_H * _N_W), dtype=jnp.float32)
    loss2 = loss_fn(pres2, tars2)

    jax.block_until_ready((loss_fc, loss_cap, loss2))

    # Pure-JAX reference (mirrors the PyTorch forward exactly).
    w = make_weights((0.3, 0.25, 0.2, 0.15, 0.1, 0.05))
    exp_t = tars[:, :, None] * w[None, :, :]
    ref_fc = jnp.mean((pres_fc - exp_t.reshape(B, -1)) ** 2)
    ref_cap = jnp.mean(jnp.sum((pres_cap - exp_t) ** 2, axis=-1))
    exp_t2 = tars2[:, :, None] * w[None, :, :]
    ref2 = jnp.mean((pres2 - exp_t2.reshape(B2, -1)) ** 2)

    assert jnp.allclose(loss_fc, ref_fc, rtol=1e-5, atol=1e-5), (loss_fc, ref_fc)
    assert jnp.allclose(loss_cap, ref_cap, rtol=1e-5, atol=1e-5), (loss_cap, ref_cap)
    assert jnp.allclose(loss2, ref2, rtol=1e-5, atol=1e-5), (loss2, ref2)
    print("KERNEL_OK")
</pallas_src>

<mosaic_0001>
module attributes {stable_mosaic.version = 11 : i64} {
  func.func @_comple_kernel(%arg0: i32, %arg1: i32, %arg2: memref<8x126xf32, #tpu.memory_space<vmem>>, %arg3: memref<8x42xf32, #tpu.memory_space<vmem>>, %arg4: memref<42x126xf32, #tpu.memory_space<vmem>>, %arg5: memref<8x128xf32, #tpu.memory_space<vmem>>) attributes {dimension_semantics = [#tpu.dimension_semantics<parallel>, #tpu.dimension_semantics<arbitrary>], iteration_bounds = array<i64: 2, 1>, scalar_prefetch = 0 : i64, scratch_operands = 0 : i64, tpu.core_type = #tpu.core_type<tc>, window_params = [{transform_indices = @transform_0, window_bounds = array<i64: 8, 126>}, {transform_indices = @transform_1, window_bounds = array<i64: 8, 42>}, {pipeline_mode = #tpu.pipeline_mode<synchronous>, transform_indices = @transform_2, window_bounds = array<i64: 42, 126>}, {transform_indices = @transform_3, window_bounds = array<i64: 8, 128>}]} {
    %c0_i32 = arith.constant 0 : i32
    %0 = arith.cmpi eq, %arg1, %c0_i32 : i32
    %1 = arith.extui %0 : i1 to i32
    %c0_i32_0 = arith.constant 0 : i32
    %2 = arith.cmpi ne, %1, %c0_i32_0 : i32
    scf.if %2 {
      %cst_12 = arith.constant 0.000000e+00 : f32
      %18 = vector.broadcast %cst_12 : f32 to vector<8x128xf32>
      %c0_13 = arith.constant 0 : index
      %c0_14 = arith.constant 0 : index
      %19 = vector.load %arg5[%c0_13, %c0_14] : memref<8x128xf32, #tpu.memory_space<vmem>>, vector<8x128xf32>
      tpu.vector_store %arg5[%c0_13, %c0_14], %18 {strides = array<i32>} : memref<8x128xf32, #tpu.memory_space<vmem>>, vector<8x128xf32>,
    } else {
    }
    %c0 = arith.constant 0 : index
    %c0_1 = arith.constant 0 : index
    %3 = vector.load %arg2[%c0, %c0_1] : memref<8x126xf32, #tpu.memory_space<vmem>>, vector<8x126xf32>
    %c0_2 = arith.constant 0 : index
    %c0_3 = arith.constant 0 : index
    %4 = vector.load %arg3[%c0_2, %c0_3] : memref<8x42xf32, #tpu.memory_space<vmem>>, vector<8x42xf32>
    %c0_4 = arith.constant 0 : index
    %c0_5 = arith.constant 0 : index
    %5 = vector.load %arg4[%c0_4, %c0_5] : memref<42x126xf32, #tpu.memory_space<vmem>>, vector<42x126xf32>
    %cst = arith.constant dense<0.000000e+00> : vector<8x126xf32>
    %6 = tpu.matmul %4, %5, %cst {dimension_numbers = #tpu.dot_dimension_numbers<[1], [0], [0], [1], [0, 0, 1, 1], [], []>} : vector<8x42xf32>, vector<42x126xf32>, vector<8x126xf32> -> vector<8x126xf32>
    %7 = arith.subf %3, %6 : vector<8x126xf32>
    %8 = arith.mulf %7, %7 : vector<8x126xf32>
    %9 = vector.shape_cast %8 : vector<8x126xf32> to vector<1x8x126xf32>
    %cst_6 = arith.constant dense<0.000000e+00> : vector<1xf32>
    %10 = vector.multi_reduction <add>, %9, %cst_6 [1, 2] : vector<1x8x126xf32> to vector<1xf32>
    %11 = vector.shape_cast %10 : vector<1xf32> to vector<1x1x1xf32>
    %12 = vector.extract %11[0, 0, 0] : f32 from vector<1x1x1xf32>
    %cst_7 = arith.constant 0.027777778 : f32
    %13 = arith.mulf %12, %cst_7 : f32
    %c0_8 = arith.constant 0 : index
    %c0_9 = arith.constant 0 : index
    %14 = vector.load %arg5[%c0_8, %c0_9] : memref<8x128xf32, #tpu.memory_space<vmem>>, vector<8x128xf32>
    %15 = vector.broadcast %13 : f32 to vector<8x128xf32>
    %16 = arith.addf %14, %15 : vector<8x128xf32>
    %c0_10 = arith.constant 0 : index
    %c0_11 = arith.constant 0 : index
    %17 = vector.load %arg5[%c0_10, %c0_11] : memref<8x128xf32, #tpu.memory_space<vmem>>, vector<8x128xf32>
    tpu.vector_store %arg5[%c0_10, %c0_11], %16 {strides = array<i32>} : memref<8x128xf32, #tpu.memory_space<vmem>>, vector<8x128xf32>,
    return
  }
  func.func @transform_0(%arg0: i32, %arg1: i32) -> (i32, i32) {
    %c1_i32 = arith.constant 1 : i32
    %0 = arith.muli %arg0, %c1_i32 : i32
    %1 = arith.addi %0, %arg1 : i32
    %c0_i32 = arith.constant 0 : i32
    %c0_i32_0 = arith.constant 0 : i32
    return %1, %c0_i32 : i32, i32
  }
  func.func @transform_1(%arg0: i32, %arg1: i32) -> (i32, i32) {
    %c1_i32 = arith.constant 1 : i32
    %0 = arith.muli %arg0, %c1_i32 : i32
    %1 = arith.addi %0, %arg1 : i32
    %c0_i32 = arith.constant 0 : i32
    %c0_i32_0 = arith.constant 0 : i32
    return %1, %c0_i32 : i32, i32
  }
  func.func @transform_2(%arg0: i32, %arg1: i32) -> (i32, i32) {
    %c0_i32 = arith.constant 0 : i32
    %c0_i32_0 = arith.constant 0 : i32
    %c0_i32_1 = arith.constant 0 : i32
    return %c0_i32, %c0_i32_0 : i32, i32
  }
  func.func @transform_3(%arg0: i32, %arg1: i32) -> (i32, i32) {
    %c0_i32 = arith.constant 0 : i32
    %c0_i32_0 = arith.constant 0 : i32
    return %arg0, %c0_i32 : i32, i32
  }
}

</mosaic_0001>

<llo_original>
// kernel: comple_loss.1
$region0: #{comple_loss.1}
  #allocation0 [shape = 'u32[]', space=smem, size = 0x4, offset = 0x4, fixed_abs, tag = 'smem constant byte address 0x4 - core index']
  #allocation1 [shape = 'u32[72,128]{1,0:T(1,128)}', space=vmem, size = 0x9000, scoped, tag = 'internal scratch']
  %s0 = inlined_call_operand.vmem [shape: f32[16,126], index: 0, kind: input, shape index: {}]
  %s1 = inlined_call_operand.vmem [shape: f32[16,42], index: 1, kind: input, shape index: {}]
  %s2 = inlined_call_operand.vmem [shape: f32[42,126], index: 2, kind: input, shape index: {}]
  %s3 = inlined_call_operand.vmem [shape: f32[16,128], index: 3, kind: output, shape index: {}]
  %s4 = sld [smem:[#allocation0]]
  $region49: #{comple_loss.1} parent=0
    _
  %s6 = ssub.s32 1, %s4
  %s7 = scalar_select 0, %s6, %s4
  loop: start=0, step=1, limit=4
  $region2: #{comple_loss.1} parent=0 // loop_pre_header
    _
  $region3: #{comple_loss.1} parent=0 // loop_header
    %s9 = sphi 0, %s13
    %p10 = scmp.ge.s32.totalorder %s9, 4
    %s16 = sphi 0, %s28
    %s17 = sphi 0, %s24
    %s18 = sphi 0, %s16
    %s19 = sphi 0, %s17
    %s20 = sphi 0, %s18
    %s21 = sphi 0, %s19
    %s33 = sphi 0, %s35
    %s36 = sphi 0, %s33
    %s37 = sphi 0, %s36
    %s53 = sphi 0, %s37
    %s61 = sphi 0, %s63
    %s64 = sphi 0, %s61
    %s65 = sphi 0, %s64
    %s81 = sphi 0, %s65
    %s85 = sphi 0, %s85
    %s87 = sphi 0, %s85
    %s88 = sphi 0, %s87
    %s102 = sphi 0, %s88
    %s108 = sphi 0, %s110
    %s111 = sphi 0, %s108
    %s112 = sphi 0, %s111
    %s128 = sphi 0, %s112
  $region4: #{comple_loss.1} parent=0 // loop_header_branch
    %12 = sbr.rel (%p10) target = $region8
  $region5: #{comple_loss.1} parent=0 // loop_body
    %s14 = ssub.s32 %s9, 1
    %s15 = ssub.s32 %s9, 2
    %s22 = sadd.s32 1, %s17
    %p23 = scmp.ge.s32.totalorder %s22, 1
    %s24 = scalar_select %p23, 0, %s22
    %s25 = sadd.s32 1, %s16
    %s26 = scalar_select %p23, %s25, %s16
    %p27 = scmp.ge.s32.totalorder %s26, 2
    %s28 = scalar_select %p27, 0, %s26
    %s29 = sadd.s32 %s16, %s17
    %s30 = sadd.s32 %s28, %s24
    %s31 = ssub.s32 %s29, %s30
    %p32 = scmp.eq.s32.totalorder %s31, 0
    %s34 = sadd.s32 %s33, 1
    %s35 = scalar_select %p32, %s33, %s34
    %p38 = pneg %p32
    %p39 = scmp.eq.s32.totalorder %s9, 1
    %p40 = por %p38, %p39
    %p41 = scmp.ne.s32.totalorder %s33, %s36
    %p42 = scmp.eq.s32.totalorder %s9, 0
    %p43 = por %p41, %p42
    %p44 = scmp.ne.s32.totalorder %s33, %s36
    %p45 = scmp.eq.s32.totalorder %s14, 1
    %p46 = por %p44, %p45
    %p47 = scmp.ne.s32.totalorder %s36, %s37
    %p48 = scmp.eq.s32.totalorder %s14, 0
    %p49 = por %p47, %p48
    %p50 = scmp.ne.s32.totalorder %s36, %s37
    %p51 = scmp.eq.s32.totalorder %s15, 1
    %p52 = por %p50, %p51
    %p54 = scmp.ne.s32.totalorder %s37, %s53
    %p55 = scmp.eq.s32.totalorder %s15, 0
    %p56 = por %p54, %p55
    %s57 = sadd.s32 %s16, %s17
    %s58 = sadd.s32 %s28, %s24
    %s59 = ssub.s32 %s57, %s58
    %p60 = scmp.eq.s32.totalorder %s59, 0
    %s62 = sadd.s32 %s61, 1
    %s63 = scalar_select %p60, %s61, %s62
    %p66 = pneg %p60
    %p67 = scmp.eq.s32.totalorder %s9, 1
    %p68 = por %p66, %p67
    %p69 = scmp.ne.s32.totalorder %s61, %s64
    %p70 = scmp.eq.s32.totalorder %s9, 0
    %p71 = por %p69, %p70
    %p72 = scmp.ne.s32.totalorder %s61, %s64
    %p73 = scmp.eq.s32.totalorder %s14, 1
    %p74 = por %p72, %p73
    %p75 = scmp.ne.s32.totalorder %s64, %s65
    %p76 = scmp.eq.s32.totalorder %s14, 0
    %p77 = por %p75, %p76
    %p78 = scmp.ne.s32.totalorder %s64, %s65
    %p79 = scmp.eq.s32.totalorder %s15, 1
    %p80 = por %p78, %p79
    %p82 = scmp.ne.s32.totalorder %s65, %s81
    %p83 = scmp.eq.s32.totalorder %s15, 0
    %p84 = por %p82, %p83
    %s86 = sadd.s32 %s85, 1
    %p89 = scmp.eq.s32.totalorder %s9, 1
    %p90 = scmp.ne.s32.totalorder %s85, %s87
    %p91 = scmp.eq.s32.totalorder %s9, 0
    %p92 = por %p90, %p91
    %p93 = scmp.ne.s32.totalorder %s85, %s87
    %p94 = scmp.eq.s32.totalorder %s14, 1
    %p95 = por %p93, %p94
    %p96 = scmp.ne.s32.totalorder %s87, %s88
    %p97 = scmp.eq.s32.totalorder %s14, 0
    %p98 = por %p96, %p97
    %p99 = scmp.ne.s32.totalorder %s87, %s88
    %p100 = scmp.eq.s32.totalorder %s15, 1
    %p101 = por %p99, %p100
    %p103 = scmp.ne.s32.totalorder %s88, %s102
    %p104 = scmp.eq.s32.totalorder %s15, 0
    %p105 = por %p103, %p104
    %s106 = ssub.s32 %s16, %s28
    %p107 = scmp.eq.s32.totalorder %s106, 0
    %s109 = sadd.s32 %s108, 1
    %s110 = scalar_select %p107, %s108, %s109
    %p113 = pneg %p107
    %p114 = scmp.eq.s32.totalorder %s9, 1
    %p115 = por %p113, %p114
    %p116 = scmp.ne.s32.totalorder %s108, %s111
    %p117 = scmp.eq.s32.totalorder %s9, 0
    %p118 = por %p116, %p117
    %p119 = scmp.ne.s32.totalorder %s108, %s111
    %p120 = scmp.eq.s32.totalorder %s14, 1
    %p121 = por %p119, %p120
    %p122 = scmp.ne.s32.totalorder %s111, %s112
    %p123 = scmp.eq.s32.totalorder %s14, 0
    %p124 = por %p122, %p123
    %p125 = scmp.ne.s32.totalorder %s111, %s112
    %p126 = scmp.eq.s32.totalorder %s15, 1
    %p127 = por %p125, %p126
    %p129 = scmp.ne.s32.totalorder %s112, %s128
    %p130 = scmp.eq.s32.totalorder %s15, 0
    %p131 = por %p129, %p130
    %p132 = scmp.le.s32.totalorder 1, %s9
    %p133 = scmp.lt.s32.totalorder %s9, 3
    %p134 = pnand %p132, %p133
    %p135 = pneg %p134
    // Predicated region
    $region9: #{comple_loss.1} parent=5 // pred_check
      _
    $region10: #{comple_loss.1} parent=5 // pred_check_branch
      %137 = sbr.rel (%p134) target = $region12
    $region11: #{comple_loss.1} parent=5 // pred_region
      %s138 = ssub.s32 %s9, 1
      // Predicated region
      $region13: #{comple_loss.1} parent=11 // pred_check
        %p139 = pneg %p98
      $region14: #{comple_loss.1} parent=11 // pred_check_branch
        %141 = sbr.rel (%p139) target = $region16
      $region15: #{comple_loss.1} parent=11 // pred_region
        _
      $region16: #{comple_loss.1} parent=11 // pred_fallthru
        _
    $region12: #{comple_loss.1} parent=5 // pred_fallthru
      _
    %p142 = scmp.lt.s32.totalorder %s9, 2
    // Predicated region
    $region17: #{comple_loss.1} parent=5 // pred_check
      %p143 = pneg %p142
    $region18: #{comple_loss.1} parent=5 // pred_check_branch
      %145 = sbr.rel (%p143) target = $region20
    $region19: #{comple_loss.1} parent=5 // pred_region
      // Predicated region
      $region21: #{comple_loss.1} parent=19 // pred_check
        %p146 = pneg %p43
      $region22: #{comple_loss.1} parent=19 // pred_check_branch
        %148 = sbr.rel (%p146) target = $region24
      $region23: #{comple_loss.1} parent=19 // pred_region
        %s149 = sadd.s32 %s16, %s17
        %p150 = scmp.lt.s32.totalorder %s149, 1
        %s151 = scalar_select %p150, %s149, 1
        %s152 = smul.addr %s151, 8
        %s153 = scalar_lea.vmem %s0, %s152
        %s154 = sadd.s32 %s16, %s17
      $region24: #{comple_loss.1} parent=19 // pred_fallthru
        _
      // Predicated region
      $region25: #{comple_loss.1} parent=19 // pred_check
        %p155 = pneg %p71
      $region26: #{comple_loss.1} parent=19 // pred_check_branch
        %157 = sbr.rel (%p155) target = $region28
      $region27: #{comple_loss.1} parent=19 // pred_region
        %s158 = sadd.s32 %s16, %s17
        %p159 = scmp.lt.s32.totalorder %s158, 1
        %s160 = scalar_select %p159, %s158, 1
        %s161 = smul.addr %s160, 8
        %s162 = scalar_lea.vmem %s1, %s161
        %s163 = sadd.s32 %s16, %s17
      $region28: #{comple_loss.1} parent=19 // pred_fallthru
        _
    $region20: #{comple_loss.1} parent=5 // pred_fallthru
      _
    %p164 = scmp.le.s32.totalorder 1, %s9
    %p165 = scmp.lt.s32.totalorder %s9, 3
    %p166 = pnand %p164, %p165
    %p167 = pneg %p166
    // Predicated region
    $region29: #{comple_loss.1} parent=5 // pred_check
      _
    $region30: #{comple_loss.1} parent=5 // pred_check_branch
      %169 = sbr.rel (%p166) target = $region32
    $region31: #{comple_loss.1} parent=5 // pred_region
      %s170 = ssub.s32 %s9, 1
      %s171 = sadd.s32 %s18, %s19
      %p172 = scmp.lt.s32.totalorder %s171, 1
      %s173 = scalar_select %p172, %s171, 1
      %s174 = smul.addr %s173, 8
      %s175 = scalar_lea.vmem %s0, %s174
      %p176 = pneg %p49
      %p177 = pneg %p46
      %s178 = sadd.s32 %s18, %s19
      %p179 = scmp.lt.s32.totalorder %s178, 1
      %s180 = scalar_select %p179, %s178, 1
      %s181 = smul.addr %s180, 8
      %s182 = scalar_lea.vmem %s1, %s181
      %p183 = pneg %p77
      %p184 = pneg %p74
      %p185 = pneg %p98
      %p186 = pneg %p95
      %p187 = pneg %p124
      %p188 = pneg %p121
      %p189 = scmp.lt.s32.totalorder %s18, 1
      %s190 = scalar_select %p189, %s18, 1
      %s191 = smul.addr %s190, 8
      %s192 = scalar_lea.vmem %s3, %s191
      %s193 = sadd.s32 %s18, %s19
      %p194 = scmp.lt.s32.totalorder %s193, 1
      %s195 = scalar_select %p194, %s193, 1
      %s196 = smul.addr %s195, 8
      %s197 = scalar_lea.vmem %s0, %s196
      %s198 = sadd.s32 %s18, %s19
      %s199 = sadd.s32 %s18, %s19
      %p200 = scmp.lt.s32.totalorder %s199, 1
      %s201 = scalar_select %p200, %s199, 1
      %s202 = smul.addr %s201, 8
      %s203 = scalar_lea.vmem %s1, %s202
      %s204 = sadd.s32 %s18, %s19
      %p205 = scmp.lt.s32.totalorder %s18, 1
      %s206 = scalar_select %p205, %s18, 1
      %s207 = smul.addr %s206, 8
      %s208 = scalar_lea.vmem %s3, %s207
      %p209 = scmp.eq.s32.totalorder %s19, 0
      // Predicated region
      $region33: #{comple_loss.1} parent=31 // pred_check
        %p210 = pneg %p209
      $region34: #{comple_loss.1} parent=31 // pred_check_branch
        %212 = sbr.rel (%p210) target = $region36
      $region35: #{comple_loss.1} parent=31 // pred_region
        %213 = vst [vmem:[%s208] sm:$0xff] 0.0
      $region36: #{comple_loss.1} parent=31 // pred_fallthru
        _
      %v214 = vld [vmem:[%s197] sm:$0xff]
      %v215 = vld [vmem:[%s203] sm:$0xff]
      %v216 = vld [vmem:[%s2] sm:$0xff]
      %v217 = vld [vmem:[%s2 + $0x8] sm:$0xff]
      %v218 = vld [vmem:[%s2 + $0x10] sm:$0xff]
      %v219 = vld [vmem:[%s2 + $0x18] sm:$0xff]
      %v220 = vld [vmem:[%s2 + $0x20] sm:$0xff]
      %v221 = vld [vmem:[%s2 + $0x28] sm:$0x3]
      %vm222 = vcmask 343040
      %v224 = vsel %vm222, %v215, 0
      %vm226 = vcmask 1041408
      %v228 = vsel %vm226, %v221, 0
      %230 = vmatpush.msra.mxu0 0.0
      %231 = vmatpush.msra.mxu0 0.0
      %232 = vmatpush.msra.mxu0 0.0
      %233 = vmatpush.msra.mxu0 0.0
      %234 = vmatpush.msra.mxu0 0.0
      %235 = vmatpush.msra.mxu0 0.0
      %236 = vmatpush.msra.mxu0 0.0
      %237 = vmatpush.msra.mxu0 0.0
      %238 = vmatpush.msra.mxu0 0.0
      %239 = vmatpush.msra.mxu0 0.0
      %240 = vmatpush.msra.mxu0 %v228
      %241 = vmatpush.msra.mxu0 %v220
      %242 = vmatpush.msra.mxu0 %v219
      %243 = vmatpush.msra.mxu0 %v218
      %244 = vmatpush.msra.mxu0 %v217
      %245 = vmatpush.msra.mxu0 %v216
      %246 = vmatmul.f32.gmra.mxu0 %v224
      %v247 = vpop.f32.mrf.mxu0
      %v248 = vadd.f32 0.0, %v247
      %249 = vdwg.mxu0
      %v250 = vsub.f32 %v214, %v248
      %v251 = vmul.f32 %v250, %v250
      %vm252 = vcmask 1031168
      %v253 = vsel %vm252, %v251, 0.0
      %254 = vadd.xlane.f32.xlu0 %v253
      %v255 = vpop.xlane.xlu0 %254
      %v256 = vrot.slane %v255, 4
      %v257 = vadd.f32 %v255, %v256
      %v258 = vrot.slane %v257, 2
      %v259 = vadd.f32 %v257, %v258
      %v260 = vrot.slane %v259, 1
      %v261 = vadd.f32 %v259, %v260
      %s262 = vtos %v261
      %s263 = smul.f32 %s262, 0.027777778
      %v264 = vld [vmem:[%s208] sm:$0xff]
      %v265 = vstv %s263
      %v266 = vadd.f32 %v264, %v265
      %267 = vst [vmem:[%s208] sm:$0xff] %v266
      %p268 = scmp.lt.s32.totalorder %s18, 1
      %s269 = scalar_select %p268, %s18, 1
      %s270 = smul.addr %s269, 8
      %s271 = scalar_lea.vmem %s3, %s270
      // Predicated region
      $region37: #{comple_loss.1} parent=31 // pred_check
        %p272 = pneg %p121
      $region38: #{comple_loss.1} parent=31 // pred_check_branch
        %274 = sbr.rel (%p272) target = $region40
      $region39: #{comple_loss.1} parent=31 // pred_region
        _
      $region40: #{comple_loss.1} parent=31 // pred_fallthru
        _
    $region32: #{comple_loss.1} parent=5 // pred_fallthru
      _
    %p275 = scmp.le.s32.totalorder 2, %s9
    // Predicated region
    $region41: #{comple_loss.1} parent=5 // pred_check
      %p276 = pneg %p275
    $region42: #{comple_loss.1} parent=5 // pred_check_branch
      %278 = sbr.rel (%p276) target = $region44
    $region43: #{comple_loss.1} parent=5 // pred_region
      %s279 = ssub.s32 %s9, 2
      // Predicated region
      $region45: #{comple_loss.1} parent=43 // pred_check
        %p280 = pneg %p127
      $region46: #{comple_loss.1} parent=43 // pred_check_branch
        %282 = sbr.rel (%p280) target = $region48
      $region47: #{comple_loss.1} parent=43 // pred_region
        %p283 = scmp.lt.s32.totalorder %s20, 1
        %s284 = scalar_select %p283, %s20, 1
        %s285 = smul.addr %s284, 8
        %s286 = scalar_lea.vmem %s3, %s285
      $region48: #{comple_loss.1} parent=43 // pred_fallthru
        _
    $region44: #{comple_loss.1} parent=5 // pred_fallthru
      _
  $region6: #{comple_loss.1} parent=0 // loop_footer
    %s13 = sadd.s32 1, %s9
  $region7: #{comple_loss.1} parent=0 // loop_footer_branch
    %8 = sbr.rel target = $region3
  $region8: #{comple_loss.1} parent=0 // loop_exit
    _

</llo_original>
